<compile_context>
chip_gen: v6e
topology: v6e:2x2x1
jax: 0.10.0
libtpu: 0.0.40
codegen_flags: <defaults>
</compile_context>

<pallas_src>
import functools

import jax
import jax.numpy as jnp
from jax.experimental import pallas as pl
from jax.experimental.pallas import tpu as pltpu


# ------------------------------- helpers ------------------------------------ #
def _round_up(x, m):
    return ((x + m - 1) // m) * m


def _fit_tile(n_pad, target):
    """Largest multiple of 128 <= target that divides n_pad (n_pad is a 128-multiple)."""
    t = max(128, min(target, n_pad))
    t -= t % 128
    while n_pad % t:
        t -= 128
    return max(t, 128)


def _pick_row_tile(n_pad, target):
    """Like _fit_tile, but prefer an even number of row tiles so the 'parallel' row axis
    keeps both v7x TensorCores busy (no effect on v5e/v6e)."""
    tm = _fit_tile(n_pad, target)
    if (n_pad // tm) % 2 == 1 and n_pad // 128 >= 2:
        t = tm
        while t >= 128:
            if n_pad % t == 0 and (n_pad // t) % 2 == 0:
                return t
            t -= 128
    return tm


def _pad2(x, rows, cols):
    return jnp.pad(x, ((0, rows - x.shape[0]), (0, cols - x.shape[1])))


def _vmem_budget_bytes():
    """Conservative per-kernel scoped-VMEM budget with headroom for compiler scratch.
    v5e/v6e: 128 MiB physical -> ~89 MiB; v7x: 64 MiB physical -> ~44 MiB."""
    cap = 64 << 20
    try:
        cap = int(pltpu.get_tpu_info().vmem_capacity_bytes)
    except Exception:
        pass
    return int(cap * 0.70)


# ----------------------------- Pallas kernels ------------------------------- #
def _xw_kernel(x_ref, w_ref, o_ref):
    """Feature transform: one row-tile of X times the (resident) weight matrix."""
    o_ref[...] = jnp.dot(
        x_ref[...], w_ref[...], preferred_element_type=jnp.float32
    ).astype(o_ref.dtype)


def _agg_kernel(a_ref, m_ref, b_ref, o_ref, acc_ref, *, tk, resident_m, apply_relu):
    """out[row_tile] = maybe_relu( sum_k A[row_tile, k_tile] @ M[k_tile] + b )."""
    k = pl.program_id(1)

    @pl.when(k == 0)
    def _():
        acc_ref[...] = jnp.zeros_like(acc_ref)

    if resident_m:
        off = pl.multiple_of(k * tk, 128)
        m_blk = m_ref[pl.ds(off, tk), :]          # M fully VMEM-resident; slice the k-tile
    else:
        m_blk = m_ref[...]
    acc_ref[...] += jnp.dot(a_ref[...], m_blk, preferred_element_type=jnp.float32)

    @pl.when(k == pl.num_programs(1) - 1)
    def _():
        out = acc_ref[...] + b_ref[...]           # bias added exactly once (finalize)
        if apply_relu:
            out = jnp.maximum(out, 0.0)
        o_ref[...] = out.astype(o_ref.dtype)


def _agg_fused_w2_kernel(a_ref, m_ref, b_ref, w2_ref, o_ref, acc_ref, *, tk, resident_m):
    """Layer-1 aggregation with the h@W2 transform fused into the finalize branch:
         o[row_tile] = relu( sum_k A[row_tile,k] @ XW1[k] + b1 ) @ W2
    so the h intermediate never touches HBM."""
    k = pl.program_id(1)

    @pl.when(k == 0)
    def _():
        acc_ref[...] = jnp.zeros_like(acc_ref)

    if resident_m:
        off = pl.multiple_of(k * tk, 128)
        m_blk = m_ref[pl.ds(off, tk), :]
    else:
        m_blk = m_ref[...]
    acc_ref[...] += jnp.dot(a_ref[...], m_blk, preferred_element_type=jnp.float32)

    @pl.when(k == pl.num_programs(1) - 1)
    def _():
        h = jnp.maximum(acc_ref[...] + b_ref[...], 0.0)
        # NOTE: padded rows give h == relu(b1) != 0; they are annihilated in layer 2 by the
        # zero columns of A_hat.  Do NOT rely on padded rows of this output being zero.
        hw2 = jnp.dot(h.astype(w2_ref.dtype), w2_ref[...],
                      preferred_element_type=jnp.float32)
        o_ref[...] = hw2.astype(o_ref.dtype)


# ---------------------------- pallas_call wrappers --------------------------- #
def _feature_transform(x_p, w_p, tm, out_dtype, vmem_limit):
    n_pad, fin_p = x_p.shape
    fo_p = w_p.shape[1]
    return pl.pallas_call(
        _xw_kernel,
        out_shape=jax.ShapeDtypeStruct((n_pad, fo_p), out_dtype),
        grid_spec=pltpu.PrefetchScalarGridSpec(
            num_scalar_prefetch=0,
            grid=(n_pad // tm,),
            in_specs=[
                pl.BlockSpec((tm, fin_p), lambda i: (i, 0)),
                pl.BlockSpec((fin_p, fo_p), lambda i: (0, 0)),   # weight stays resident
            ],
            out_specs=pl.BlockSpec((tm, fo_p), lambda i: (i, 0)),
        ),
        compiler_params=pltpu.CompilerParams(
            dimension_semantics=("parallel",),
            vmem_limit_bytes=int(vmem_limit),
        ),
        cost_estimate=pl.CostEstimate(
            flops=2 * n_pad * fin_p * fo_p,
            transcendentals=0,
            bytes_accessed=(x_p.dtype.itemsize * n_pad * fin_p
                            + w_p.dtype.itemsize * fin_p * fo_p
                            + jnp.dtype(out_dtype).itemsize * n_pad * fo_p),
        ),
    )(x_p, w_p)


def _aggregate(a_p, m_p, b_p, *, tm, tk, out_dtype, apply_relu=False, w2_p=None,
               vmem_budget):
    n_pad = a_p.shape[0]
    fm = m_p.shape[1]                               # width of M operand (== acc width)
    fo = w2_p.shape[1] if w2_p is not None else fm  # output width
    grid_m = n_pad // tm
    grid_k = n_pad // tk
    a_item = a_p.dtype.itemsize
    m_item = m_p.dtype.itemsize
    o_item = jnp.dtype(out_dtype).itemsize

    def vmem_need(resident):
        m_bytes = 2 * (n_pad if resident else tk) * fm * m_item   # double-buffered spec
        w2_bytes = (2 * w2_p.shape[0] * fo * w2_p.dtype.itemsize) if w2_p is not None else 0
        return (2 * tm * tk * a_item          # A tiles (double-buffered)
                + m_bytes
                + w2_bytes
                + 2 * tm * fo * o_item        # output tiles
                + tm * fm * 4                 # f32 accumulator scratch
                + 8 * max(fm, fo) * 4)        # bias rows + slack

    resident_m = vmem_need(True) <= vmem_budget
    vmem_limit = int(min(max(vmem_need(resident_m) * 2, 32 << 20), vmem_budget))

    if resident_m:
        # Whole XW/hW matrix is DMA'd into VMEM once (constant block index -> no re-fetch)
        # and reused for every row tile; only A is streamed from HBM.
        m_spec = pl.BlockSpec((n_pad, fm), lambda i, k: (0, 0))
        m_stream_bytes = n_pad * fm * m_item
    else:
        m_spec = pl.BlockSpec((tk, fm), lambda i, k: (k, 0))
        m_stream_bytes = grid_m * n_pad * fm * m_item

    in_specs = [
        pl.BlockSpec((tm, tk), lambda i, k: (i, k)),       # A_hat tile (streamed)
        m_spec,                                            # XW / hW operand
        pl.BlockSpec((1, fm), lambda i, k: (0, 0)),        # bias row (resident)
    ]
    operands = [a_p, m_p, b_p]
    if w2_p is not None:
        in_specs.append(pl.BlockSpec(w2_p.shape, lambda i, k: (0, 0)))   # W2 resident
        operands.append(w2_p)
        kernel = functools.partial(_agg_fused_w2_kernel, tk=tk, resident_m=resident_m)
        flops = 2 * n_pad * n_pad * fm + 2 * n_pad * fm * fo
    else:
        kernel = functools.partial(_agg_kernel, tk=tk, resident_m=resident_m,
                                   apply_relu=apply_relu)
        flops = 2 * n_pad * n_pad * fm

    return pl.pallas_call(
        kernel,
        out_shape=jax.ShapeDtypeStruct((n_pad, fo), out_dtype),
        grid_spec=pltpu.PrefetchScalarGridSpec(
            num_scalar_prefetch=0,
            grid=(grid_m, grid_k),                         # reduction axis last
            in_specs=in_specs,
            out_specs=pl.BlockSpec((tm, fo), lambda i, k: (i, 0)),
            scratch_shapes=[pltpu.VMEM((tm, fm), jnp.float32)],
        ),
        compiler_params=pltpu.CompilerParams(
            dimension_semantics=("parallel", "arbitrary"),
            vmem_limit_bytes=vmem_limit,
        ),
        cost_estimate=pl.CostEstimate(
            flops=flops,
            transcendentals=0,
            bytes_accessed=(a_item * n_pad * n_pad
                            + m_stream_bytes
                            + o_item * n_pad * fo),
        ),
    )(*operands)


def gcn_encoder_pallas(a_hat, x, w1, b1, w2, b2, *,
                       tm_target=512, tk_target=2048, ft_rows_target=2048,
                       compute_dtype=jnp.bfloat16):
    """Two-layer GCN forward.  compute_dtype controls the A_hat / XW / hW HBM streams
    (f32 accumulation is kept everywhere); bfloat16 is the portable default."""
    n, fin = x.shape
    hid = w1.shape[1]
    fout = w2.shape[1]

    n_pad = _round_up(n, 128)
    fin_p = _round_up(fin, 128)
    h_p = _round_up(hid, 128)
    fo_p = _round_up(fout, 128)
    tm = _pick_row_tile(n_pad, tm_target)
    tk = _fit_tile(n_pad, tk_target)
    tm_ft = _fit_tile(n_pad, ft_rows_target)
    vmem_budget = _vmem_budget_bytes()

    # Zero-pad to lane-dense (multiple-of-128) shapes.  A_hat is cast to compute_dtype
    # BEFORE padding so only one padded N^2 array is materialized in HBM.
    a_p = _pad2(a_hat.astype(compute_dtype), n_pad, n_pad)
    x_p = _pad2(x.astype(jnp.float32), n_pad, fin_p)
    w1_p = _pad2(w1.astype(jnp.float32), fin_p, h_p)
    b1_p = _pad2(b1.reshape(1, -1).astype(jnp.float32), 1, h_p)
    w2_p = _pad2(w2.astype(compute_dtype), h_p, fo_p)
    b2_p = _pad2(b2.reshape(1, -1).astype(jnp.float32), 1, fo_p)

    # XW1 once (large row tiles; W1 resident), emitted directly in compute_dtype.
    xw1 = _feature_transform(x_p, w1_p, tm_ft, compute_dtype, vmem_budget)

    # Layer 1 aggregation with fused bias + ReLU + (h @ W2) epilogue.  The h intermediate
    # never hits HBM; the output is hW2 in compute_dtype.
    hw2 = _aggregate(a_p, xw1, b1_p, tm=tm, tk=tk, out_dtype=compute_dtype,
                     w2_p=w2_p, vmem_budget=vmem_budget)

    # Layer 2 aggregation with bias epilogue (f32 output).
    out = _aggregate(a_p, hw2, b2_p, tm=tm, tk=tk, out_dtype=jnp.float32,
                     apply_relu=False, vmem_budget=vmem_budget)

    return out[:n, :fout]


# --------------------------------- JAX glue ---------------------------------- #
def build_normalized_adjacency(edge_index, num_nodes):
    """Dense A_hat = D^{-1/2} A D^{-1/2}, matching PyG gcn_norm(add_self_loops=False)."""
    # TODO(synk): stays in plain JAX; a sparse segment-sum Pallas kernel is the long-term fix.
    src = edge_index[0]  # message sources j
    dst = edge_index[1]  # message targets i
    a = jnp.zeros((num_nodes, num_nodes), jnp.float32).at[dst, src].add(1.0)
    deg = jnp.sum(a, axis=1)  # in-degree per target node
    d_inv_sqrt = jnp.where(deg > 0.0, 1.0 / jnp.sqrt(jnp.maximum(deg, 1e-12)), 0.0)
    return d_inv_sqrt[:, None] * a * d_inv_sqrt[None, :]


def gcn_encoder_reference(a_hat, x, w1, b1, w2, b2):
    h = jnp.maximum(a_hat @ (x @ w1) + b1, 0.0)
    return a_hat @ (h @ w2) + b2


# ----------------------------------- main ------------------------------------ #
if __name__ == "__main__":
    key = jax.random.PRNGKey(0)
    k_x, k_e1, k_e2, k_w1, k_w2 = jax.random.split(key, 5)

    # Small synthetic graph / model sizes consistent with the module.
    num_nodes = 16
    in_channels = 8
    hidden_channels = 32
    out_channels = 16
    num_edges = 48

    x = jax.random.normal(k_x, (num_nodes, in_channels), dtype=jnp.float32)
    src = jax.random.randint(k_e1, (num_edges,), 0, num_nodes)
    dst = jax.random.randint(k_e2, (num_edges,), 0, num_nodes)
    edge_index = jnp.stack([src, dst], axis=0)

    def glorot(k, shape):
        limit = jnp.sqrt(6.0 / (shape[0] + shape[1]))
        return jax.random.uniform(k, shape, jnp.float32, -limit, limit)

    w1 = glorot(k_w1, (in_channels, hidden_channels))
    b1 = jnp.zeros((1, hidden_channels), jnp.float32)
    w2 = glorot(k_w2, (hidden_channels, out_channels))
    b2 = jnp.zeros((1, out_channels), jnp.float32)

    a_hat = build_normalized_adjacency(edge_index, num_nodes)
    ref = gcn_encoder_reference(a_hat, x, w1, b1, w2, b2)

    # f32 compute path: tight validation of the kernel structure.
    out_f32 = jax.block_until_ready(
        gcn_encoder_pallas(a_hat, x, w1, b1, w2, b2, compute_dtype=jnp.float32))
    assert out_f32.shape == (num_nodes, out_channels)
    assert jnp.allclose(out_f32, ref, atol=1e-3, rtol=1e-3), "f32 Pallas output mismatch"

    # Default bf16 compute path (halves the dominant N^2 HBM stream); looser tolerance
    # because the D^{-1/2} weights in A_hat and the XW/hW operands are quantized to bf16.
    out_bf16 = jax.block_until_ready(gcn_encoder_pallas(a_hat, x, w1, b1, w2, b2))
    assert out_bf16.shape == (num_nodes, out_channels)
    assert jnp.allclose(out_bf16, ref, atol=7e-2, rtol=5e-2), "bf16 Pallas output mismatch"

    print("KERNEL_OK")
</pallas_src>

<mosaic_0001>
module attributes {stable_mosaic.version = 11 : i64} {
  func.func @_xw_kernel(%arg0: i32, %arg1: memref<128x128xf32, #tpu.memory_space<vmem>>, %arg2: memref<128x128xf32, #tpu.memory_space<vmem>>, %arg3: memref<128x128xf32, #tpu.memory_space<vmem>>) attributes {dimension_semantics = [#tpu.dimension_semantics<parallel>], iteration_bounds = array<i64: 1>, scalar_prefetch = 0 : i64, scratch_operands = 0 : i64, tpu.core_type = #tpu.core_type<tc>, window_params = [{transform_indices = @transform_0, window_bounds = array<i64: 128, 128>}, {pipeline_mode = #tpu.pipeline_mode<synchronous>, transform_indices = @transform_1, window_bounds = array<i64: 128, 128>}, {transform_indices = @transform_2, window_bounds = array<i64: 128, 128>}]} {
    %c0 = arith.constant 0 : index
    %c0_0 = arith.constant 0 : index
    %0 = vector.load %arg1[%c0, %c0_0] : memref<128x128xf32, #tpu.memory_space<vmem>>, vector<128x128xf32>
    %c0_1 = arith.constant 0 : index
    %c0_2 = arith.constant 0 : index
    %1 = vector.load %arg2[%c0_1, %c0_2] : memref<128x128xf32, #tpu.memory_space<vmem>>, vector<128x128xf32>
    %cst = arith.constant dense<0.000000e+00> : vector<128x128xf32>
    %2 = tpu.matmul %0, %1, %cst {dimension_numbers = #tpu.dot_dimension_numbers<[1], [0], [0], [1], [0, 0, 1, 1], [], []>} : vector<128x128xf32>, vector<128x128xf32>, vector<128x128xf32> -> vector<128x128xf32>
    %c0_3 = arith.constant 0 : index
    %c0_4 = arith.constant 0 : index
    %3 = vector.load %arg3[%c0_3, %c0_4] : memref<128x128xf32, #tpu.memory_space<vmem>>, vector<128x128xf32>
    tpu.vector_store %arg3[%c0_3, %c0_4], %2 {strides = array<i32>} : memref<128x128xf32, #tpu.memory_space<vmem>>, vector<128x128xf32>,
    return
  }
  func.func @transform_0(%arg0: i32) -> (i32, i32) {
    %c0_i32 = arith.constant 0 : i32
    %c0_i32_0 = arith.constant 0 : i32
    return %arg0, %c0_i32 : i32, i32
  }
  func.func @transform_1(%arg0: i32) -> (i32, i32) {
    %c0_i32 = arith.constant 0 : i32
    %c0_i32_0 = arith.constant 0 : i32
    %c0_i32_1 = arith.constant 0 : i32
    return %c0_i32, %c0_i32_0 : i32, i32
  }
  func.func @transform_2(%arg0: i32) -> (i32, i32) {
    %c0_i32 = arith.constant 0 : i32
    %c0_i32_0 = arith.constant 0 : i32
    return %arg0, %c0_i32 : i32, i32
  }
}

</mosaic_0001>

<llo_original>
// kernel: tpu_custom_call.1
$region0: #{tpu_custom_call.1}
  #allocation0 [shape = 'u32[]', space=smem, size = 0x4, offset = 0x4, fixed_abs, tag = 'smem constant byte address 0x4 - core index']
  #allocation1 [shape = 'u32[144,128]{1,0:T(1,128)}', space=vmem, size = 0x12000, scoped, tag = 'internal scratch']
  %s0 = inlined_call_operand.hbm [shape: f32[128,128], index: 0, kind: input, shape index: {}]
  %s1 = inlined_call_operand.hbm [shape: f32[128,128], index: 1, kind: input, shape index: {}]
  %s2 = inlined_call_operand.hbm [shape: f32[128,128], index: 2, kind: output, shape index: {}]
  %s3 = sld [smem:[#allocation0]]
  $region26: #{tpu_custom_call.1} parent=0
    _
  %s5 = ssub.s32 1, %s3
  %s6 = scalar_select 0, %s5, %s3
  $region1: #{tpu_custom_call.1} parent=0
    #allocation2 [shape = 'u8[65536]{0}', space=vmem, size = 0x10000, scoped, tag = 'input window, operand 0, single buffered']
    #allocation3 [shape = 's32[1]{0}', space=sflag, size = 0x4, scoped, tag = 'scoped memory for tpu_custom_call.1']
    #allocation4 [shape = 's32[1]{0}', space=sflag, size = 0x4, scoped, tag = 'scoped memory for tpu_custom_call.1']
    #allocation5 [shape = 'u8[65536]{0}', space=vmem, size = 0x10000, scoped, tag = 'input window, operand 1, single buffered']
    #allocation6 [shape = 's32[1]{0}', space=sflag, size = 0x4, scoped, tag = 'scoped memory for tpu_custom_call.1']
    #allocation7 [shape = 'u8[65536]{0}', space=vmem, size = 0x10000, scoped, tag = 'output window, operand 0, single buffered']
    %7 = vsyncpa [#allocation3], 0
    %8 = vsyncpa [#allocation6], 0
    %9 = vsyncpa [#allocation4], 0
    // Predicated region
    $region2: #{tpu_custom_call.1} parent=1 // pred_check
      _
    $region3: #{tpu_custom_call.1} parent=1 // pred_check_branch
      %11 = sbr.rel (0) target = $region5
    $region4: #{tpu_custom_call.1} parent=1 // pred_region
      %s13 = ssub.s32 2048, 2048
      %14 = vsyncadd [#allocation3], %s13
      %s15 = sshll.u32 [#allocation2], 4
      %s16 = int_to_ptr.vmem [resolvable:$true] %s15
      %21 = dma.hbm_to_vmem [thread:$0]  %s0, 2048, %s16, [#allocation3], 128, 128, 8
    $region5: #{tpu_custom_call.1} parent=1 // pred_fallthru
      _
    // Predicated region
    $region6: #{tpu_custom_call.1} parent=1 // pred_check
      _
    $region7: #{tpu_custom_call.1} parent=1 // pred_check_branch
      %23 = sbr.rel (0) target = $region9
    $region8: #{tpu_custom_call.1} parent=1 // pred_region
      %s25 = ssub.s32 2048, 2048
      %26 = vsyncadd [#allocation6], %s25
      %s27 = sshll.u32 [#allocation5], 4
      %s28 = int_to_ptr.vmem [resolvable:$true] %s27
      %33 = dma.hbm_to_vmem [thread:$0]  %s1, 2048, %s28, [#allocation6], 128, 128, 8
    $region9: #{tpu_custom_call.1} parent=1 // pred_fallthru
      _
    // Predicated region
    $region10: #{tpu_custom_call.1} parent=1 // pred_check
      _
    $region11: #{tpu_custom_call.1} parent=1 // pred_check_branch
      %35 = sbr.rel (0) target = $region13
    $region12: #{tpu_custom_call.1} parent=1 // pred_region
      %36 = dma.done [#allocation3], 2048
    $region13: #{tpu_custom_call.1} parent=1 // pred_fallthru
      _
    // Predicated region
    $region14: #{tpu_custom_call.1} parent=1 // pred_check
      _
    $region15: #{tpu_custom_call.1} parent=1 // pred_check_branch
      %38 = sbr.rel (0) target = $region17
    $region16: #{tpu_custom_call.1} parent=1 // pred_region
      %39 = dma.done [#allocation6], 2048
    $region17: #{tpu_custom_call.1} parent=1 // pred_fallthru
      _
    %v40 = vld [vmem:[#allocation2] sm:$0xff]
    %v41 = vld [vmem:[#allocation2 + $0x8] sm:$0xff]
    %v42 = vld [vmem:[#allocation2 + $0x10] sm:$0xff]
    %v43 = vld [vmem:[#allocation2 + $0x18] sm:$0xff]
    %v44 = vld [vmem:[#allocation2 + $0x20] sm:$0xff]
    %v45 = vld [vmem:[#allocation2 + $0x28] sm:$0xff]
    %v46 = vld [vmem:[#allocation2 + $0x30] sm:$0xff]
    %v47 = vld [vmem:[#allocation2 + $0x38] sm:$0xff]
    %v48 = vld [vmem:[#allocation2 + $0x40] sm:$0xff]
    %v49 = vld [vmem:[#allocation2 + $0x48] sm:$0xff]
    %v50 = vld [vmem:[#allocation2 + $0x50] sm:$0xff]
    %v51 = vld [vmem:[#allocation2 + $0x58] sm:$0xff]
    %v52 = vld [vmem:[#allocation2 + $0x60] sm:$0xff]
    %v53 = vld [vmem:[#allocation2 + $0x68] sm:$0xff]
    %v54 = vld [vmem:[#allocation2 + $0x70] sm:$0xff]
    %v55 = vld [vmem:[#allocation2 + $0x78] sm:$0xff]
    %v56 = vld [vmem:[#allocation5] sm:$0xff]
    %v57 = vld [vmem:[#allocation5 + $0x8] sm:$0xff]
    %v58 = vld [vmem:[#allocation5 + $0x10] sm:$0xff]
    %v59 = vld [vmem:[#allocation5 + $0x18] sm:$0xff]
    %v60 = vld [vmem:[#allocation5 + $0x20] sm:$0xff]
    %v61 = vld [vmem:[#allocation5 + $0x28] sm:$0xff]
    %v62 = vld [vmem:[#allocation5 + $0x30] sm:$0xff]
    %v63 = vld [vmem:[#allocation5 + $0x38] sm:$0xff]
    %v64 = vld [vmem:[#allocation5 + $0x40] sm:$0xff]
    %v65 = vld [vmem:[#allocation5 + $0x48] sm:$0xff]
    %v66 = vld [vmem:[#allocation5 + $0x50] sm:$0xff]
    %v67 = vld [vmem:[#allocation5 + $0x58] sm:$0xff]
    %v68 = vld [vmem:[#allocation5 + $0x60] sm:$0xff]
    %v69 = vld [vmem:[#allocation5 + $0x68] sm:$0xff]
    %v70 = vld [vmem:[#allocation5 + $0x70] sm:$0xff]
    %v71 = vld [vmem:[#allocation5 + $0x78] sm:$0xff]
    %72 = vmatprep.subr.mxu0 0.0
    %73 = vmatpush1.msra.mxu0 %v71
    %74 = vmatprep.subr.mxu0 0.0
    %75 = vmatpush1.msra.mxu0 %v70
    %76 = vmatprep.subr.mxu0 0.0
    %77 = vmatpush1.msra.mxu0 %v69
    %78 = vmatprep.subr.mxu0 0.0
    %79 = vmatpush1.msra.mxu0 %v68
    %80 = vmatprep.subr.mxu0 0.0
    %81 = vmatpush1.msra.mxu0 %v67
    %82 = vmatprep.subr.mxu0 0.0
    %83 = vmatpush1.msra.mxu0 %v66
    %84 = vmatprep.subr.mxu0 0.0
    %85 = vmatpush1.msra.mxu0 %v65
    %86 = vmatprep.subr.mxu0 0.0
    %87 = vmatpush1.msra.mxu0 %v64
    %88 = vmatprep.subr.mxu0 0.0
    %89 = vmatpush1.msra.mxu0 %v63
    %90 = vmatprep.subr.mxu0 0.0
    %91 = vmatpush1.msra.mxu0 %v62
    %92 = vmatprep.subr.mxu0 0.0
    %93 = vmatpush1.msra.mxu0 %v61
    %94 = vmatprep.subr.mxu0 0.0
    %95 = vmatpush1.msra.mxu0 %v60
    %96 = vmatprep.subr.mxu0 0.0
    %97 = vmatpush1.msra.mxu0 %v59
    %98 = vmatprep.subr.mxu0 0.0
    %99 = vmatpush1.msra.mxu0 %v58
    %100 = vmatprep.subr.mxu0 0.0
    %101 = vmatpush1.msra.mxu0 %v57
    %102 = vmatprep.subr.mxu0 0.0
    %103 = vmatpush1.msra.mxu0 %v56
    %104 = vmatprep.subr.mxu0 0.0
    %105 = vmatpush2.msra.mxu0 0.0
    %106 = vmatprep.subr.mxu0 0.0
    %107 = vmatpush2.msra.mxu0 0.0
    %108 = vmatprep.subr.mxu0 0.0
    %109 = vmatpush2.msra.mxu0 0.0
    %110 = vmatprep.subr.mxu0 0.0
    %111 = vmatpush2.msra.mxu0 0.0
    %112 = vmatprep.subr.mxu0 0.0
    %113 = vmatpush2.msra.mxu0 0.0
    %114 = vmatprep.subr.mxu0 0.0
    %115 = vmatpush2.msra.mxu0 0.0
    %116 = vmatprep.subr.mxu0 0.0
    %117 = vmatpush2.msra.mxu0 0.0
    %118 = vmatprep.subr.mxu0 0.0
    %119 = vmatpush2.msra.mxu0 0.0
    %120 = vmatprep.subr.mxu0 0.0
    %121 = vmatpush2.msra.mxu0 0.0
    %122 = vmatprep.subr.mxu0 0.0
    %123 = vmatpush2.msra.mxu0 0.0
    %124 = vmatprep.subr.mxu0 0.0
    %125 = vmatpush2.msra.mxu0 0.0
    %126 = vmatprep.subr.mxu0 0.0
    %127 = vmatpush2.msra.mxu0 0.0
    %128 = vmatprep.subr.mxu0 0.0
    %129 = vmatpush2.msra.mxu0 0.0
    %130 = vmatprep.subr.mxu0 0.0
    %131 = vmatpush2.msra.mxu0 0.0
    %132 = vmatprep.subr.mxu0 0.0
    %133 = vmatpush2.msra.mxu0 0.0
    %134 = vmatprep.subr.mxu0 0.0
    %135 = vmatpush2.msra.mxu0 0.0
    %136 = vmatprep.mubr.f32.mxu0 0.0
    %137 = vmatmul.mubr.f32.gmra.mxu0 %v40
    %v138 = vpop.f32.mrf.mxu0
    %v139 = vadd.f32 0.0, %v138
    %v140 = vpop.f32.mrf.mxu0
    %141 = vmatprep.mubr.f32.mxu0 0.0
    %142 = vmatmul.mubr.f32.gmra.mxu0 %v41
    %v143 = vpop.f32.mrf.mxu0
    %v144 = vadd.f32 0.0, %v143
    %v145 = vpop.f32.mrf.mxu0
    %146 = vmatprep.mubr.f32.mxu0 0.0
    %147 = vmatmul.mubr.f32.gmra.mxu0 %v42
    %v148 = vpop.f32.mrf.mxu0
    %v149 = vadd.f32 0.0, %v148
    %v150 = vpop.f32.mrf.mxu0
    %151 = vmatprep.mubr.f32.mxu0 0.0
    %152 = vmatmul.mubr.f32.gmra.mxu0 %v43
    %v153 = vpop.f32.mrf.mxu0
    %v154 = vadd.f32 0.0, %v153
    %v155 = vpop.f32.mrf.mxu0
    %156 = vmatprep.mubr.f32.mxu0 0.0
    %157 = vmatmul.mubr.f32.gmra.mxu0 %v44
    %v158 = vpop.f32.mrf.mxu0
    %v159 = vadd.f32 0.0, %v158
    %v160 = vpop.f32.mrf.mxu0
    %161 = vmatprep.mubr.f32.mxu0 0.0
    %162 = vmatmul.mubr.f32.gmra.mxu0 %v45
    %v163 = vpop.f32.mrf.mxu0
    %v164 = vadd.f32 0.0, %v163
    %v165 = vpop.f32.mrf.mxu0
    %166 = vmatprep.mubr.f32.mxu0 0.0
    %167 = vmatmul.mubr.f32.gmra.mxu0 %v46
    %v168 = vpop.f32.mrf.mxu0
    %v169 = vadd.f32 0.0, %v168
    %v170 = vpop.f32.mrf.mxu0
    %171 = vmatprep.mubr.f32.mxu0 0.0
    %172 = vmatmul.mubr.f32.gmra.mxu0 %v47
    %v173 = vpop.f32.mrf.mxu0
    %v174 = vadd.f32 0.0, %v173
    %v175 = vpop.f32.mrf.mxu0
    %176 = vmatprep.mubr.f32.mxu0 0.0
    %177 = vmatmul.mubr.f32.gmra.mxu0 %v48
    %v178 = vpop.f32.mrf.mxu0
    %v179 = vadd.f32 0.0, %v178
    %v180 = vpop.f32.mrf.mxu0
    %181 = vmatprep.mubr.f32.mxu0 0.0
    %182 = vmatmul.mubr.f32.gmra.mxu0 %v49
    %v183 = vpop.f32.mrf.mxu0
    %v184 = vadd.f32 0.0, %v183
    %v185 = vpop.f32.mrf.mxu0
    %186 = vmatprep.mubr.f32.mxu0 0.0
    %187 = vmatmul.mubr.f32.gmra.mxu0 %v50
    %v188 = vpop.f32.mrf.mxu0
    %v189 = vadd.f32 0.0, %v188
    %v190 = vpop.f32.mrf.mxu0
    %191 = vmatprep.mubr.f32.mxu0 0.0
    %192 = vmatmul.mubr.f32.gmra.mxu0 %v51
    %v193 = vpop.f32.mrf.mxu0
    %v194 = vadd.f32 0.0, %v193
    %v195 = vpop.f32.mrf.mxu0
    %196 = vmatprep.mubr.f32.mxu0 0.0
    %197 = vmatmul.mubr.f32.gmra.mxu0 %v52
    %v198 = vpop.f32.mrf.mxu0
    %v199 = vadd.f32 0.0, %v198
    %v200 = vpop.f32.mrf.mxu0
    %201 = vmatprep.mubr.f32.mxu0 0.0
    %202 = vmatmul.mubr.f32.gmra.mxu0 %v53
    %v203 = vpop.f32.mrf.mxu0
    %v204 = vadd.f32 0.0, %v203
    %v205 = vpop.f32.mrf.mxu0
    %206 = vmatprep.mubr.f32.mxu0 0.0
    %207 = vmatmul.mubr.f32.gmra.mxu0 %v54
    %v208 = vpop.f32.mrf.mxu0
    %v209 = vadd.f32 0.0, %v208
    %v210 = vpop.f32.mrf.mxu0
    %211 = vmatprep.mubr.f32.mxu0 0.0
    %212 = vmatmul.mubr.f32.gmra.mxu0 %v55
    %v213 = vpop.f32.mrf.mxu0
    %v214 = vadd.f32 0.0, %v213
    %v215 = vpop.f32.mrf.mxu0
    %216 = vdwg.mxu0
    %217 = vst [vmem:[#allocation7] sm:$0xff] %v139
    %218 = vst [vmem:[#allocation7 + $0x8] sm:$0xff] %v144
    %219 = vst [vmem:[#allocation7 + $0x10] sm:$0xff] %v149
    %220 = vst [vmem:[#allocation7 + $0x18] sm:$0xff] %v154
    %221 = vst [vmem:[#allocation7 + $0x20] sm:$0xff] %v159
    %222 = vst [vmem:[#allocation7 + $0x28] sm:$0xff] %v164
    %223 = vst [vmem:[#allocation7 + $0x30] sm:$0xff] %v169
    %224 = vst [vmem:[#allocation7 + $0x38] sm:$0xff] %v174
    %225 = vst [vmem:[#allocation7 + $0x40] sm:$0xff] %v179
    %226 = vst [vmem:[#allocation7 + $0x48] sm:$0xff] %v184
    %227 = vst [vmem:[#allocation7 + $0x50] sm:$0xff] %v189
    %228 = vst [vmem:[#allocation7 + $0x58] sm:$0xff] %v194
    %229 = vst [vmem:[#allocation7 + $0x60] sm:$0xff] %v199
    %230 = vst [vmem:[#allocation7 + $0x68] sm:$0xff] %v204
    %231 = vst [vmem:[#allocation7 + $0x70] sm:$0xff] %v209
    %232 = vst [vmem:[#allocation7 + $0x78] sm:$0xff] %v214
    // Predicated region
    $region18: #{tpu_custom_call.1} parent=1 // pred_check
      _
    $region19: #{tpu_custom_call.1} parent=1 // pred_check_branch
      %234 = sbr.rel (0) target = $region21
    $region20: #{tpu_custom_call.1} parent=1 // pred_region
      %s236 = ssub.s32 2048, 2048
      %237 = vsyncadd [#allocation4], %s236
      %s238 = sshll.u32 [#allocation7], 4
      %s239 = int_to_ptr.vmem [resolvable:$true] %s238
      %244 = dma.vmem_to_hbm [thread:$0]  %s239, 2048, %s2, [#allocation4], 128, 128, 8
    $region21: #{tpu_custom_call.1} parent=1 // pred_fallthru
      _
    // Predicated region
    $region22: #{tpu_custom_call.1} parent=1 // pred_check
      _
    $region23: #{tpu_custom_call.1} parent=1 // pred_check_branch
      %246 = sbr.rel (0) target = $region25
    $region24: #{tpu_custom_call.1} parent=1 // pred_region
      %247 = dma.done [#allocation4], 2048
    $region25: #{tpu_custom_call.1} parent=1 // pred_fallthru
      _
    %248 = vsyncpa [#allocation3], 1
    %249 = vsyncpa [#allocation6], 1
    %250 = vsyncpa [#allocation4], 1

</llo_original>
